<compile_context>
chip_gen: v6e
topology: v6e:2x2x1
jax: 0.10.0
libtpu: 0.0.40
codegen_flags: <defaults>
</compile_context>

<pallas_src>
import functools

import jax
import jax.numpy as jnp
from jax.experimental import pallas as pl
from jax.experimental.pallas import tpu as pltpu

_LANE = 128
_SUBLANE = 8


def _add_pos_kernel(x_ref, pos_ref, o_ref):
    # Native-dtype elementwise add; pos block (1, tc) broadcasts over rows.
    o_ref[...] = (x_ref[...] + pos_ref[...]).astype(o_ref.dtype)


def _add_pos_dropout_kernel(x_ref, pos_ref, bits_ref, o_ref, *, threshold, inv_keep):
    y = (x_ref[...] + pos_ref[...]).astype(jnp.float32)
    # Inverted dropout: drop iff bits < threshold (threshold = rate * 2^32).
    keep = bits_ref[...] >= jnp.uint32(threshold)
    o_ref[...] = jnp.where(keep, y * jnp.float32(inv_keep), 0.0).astype(o_ref.dtype)


def _pick_tiles(B, C, bytes_per_elem, budget_bytes):
    """Tile (tb, tc) of the flattened (B, C) view from a per-block byte budget.

    tc is the full row when it fits (legal even if C % 128 != 0), else the
    largest multiple of 128 within budget.  tb is a multiple of 8 (or the full
    batch).  Works for any B / C, no divisibility requirements.
    """
    if C <= _LANE or C * bytes_per_elem <= budget_bytes:
        tc = C
    else:
        tc = max(_LANE, (budget_bytes // (bytes_per_elem * _LANE)) * _LANE)
        tc = min(tc, C)

    rows = max(1, budget_bytes // (tc * bytes_per_elem))
    if rows >= B:
        tb = B
    else:
        tb = min(B, max(_SUBLANE, (rows // _SUBLANE) * _SUBLANE))
        if tb < _SUBLANE:          # only possible when B < 8
            tb = B

    # Prefer >= 2 grid steps so both v7x TensorCores get work (only when the
    # batch is large enough to keep tb a multiple of 8).
    if tb == B and B >= 2 * _SUBLANE and pl.cdiv(C, tc) == 1:
        tb = max(_SUBLANE, ((B // 2) // _SUBLANE) * _SUBLANE)
    return tb, tc


def embeddings_forward(x, position_embeddings, *, dropout_rate=0.2,
                       deterministic=True, rng_key=None):
    """Pallas equivalent of Embeddings.forward: dropout(x + position_embeddings)."""
    B, N, H = x.shape
    assert position_embeddings.shape == (1, N, H)
    C = N * H

    # Flatten (N, H) -> one lane-dense trailing axis (free, row-major contiguous).
    x2 = x.reshape(B, C)
    pos2 = position_embeddings.reshape(1, C)

    use_dropout = (not deterministic) and float(dropout_rate) > 0.0

    x_itemsize = jnp.dtype(x.dtype).itemsize
    pos_itemsize = jnp.dtype(position_embeddings.dtype).itemsize
    bits_itemsize = 4 if use_dropout else 0
    per_elem = 2 * x_itemsize + bits_itemsize          # input + output (+ bits)

    budget = 6 << 20                                   # ~6 MiB live block data / step
    tb, tc = _pick_tiles(B, C, per_elem, budget)
    grid = (pl.cdiv(B, tb), pl.cdiv(C, tc))

    x_spec = pl.BlockSpec((tb, tc), lambda i, j: (i, j))
    pos_spec = pl.BlockSpec((1, tc), lambda i, j: (0, j))
    out_spec = pl.BlockSpec((tb, tc), lambda i, j: (i, j))

    # VMEM need: double-buffered x/out/bits blocks + the resident pos block.
    block_bytes = tb * tc * per_elem
    pos_block_bytes = tc * pos_itemsize
    needed = 2 * block_bytes + 2 * pos_block_bytes + (1 << 20)
    vmem_limit = int(min(max(needed, 16 << 20), 96 << 20))

    cost = pl.CostEstimate(
        flops=x.size,
        transcendentals=0,
        bytes_accessed=2 * x.size * x_itemsize + C * pos_itemsize
        + x.size * bits_itemsize,
    )
    cparams = pltpu.CompilerParams(
        dimension_semantics=("parallel", "parallel"),
        vmem_limit_bytes=vmem_limit,
    )

    if not use_dropout:
        out2 = pl.pallas_call(
            _add_pos_kernel,
            out_shape=jax.ShapeDtypeStruct((B, C), x.dtype),
            grid=grid,
            in_specs=[x_spec, pos_spec],
            out_specs=out_spec,
            compiler_params=cparams,
            cost_estimate=cost,
        )(x2, pos2)
        return out2.reshape(B, N, H)

    if rng_key is None:
        rng_key = jax.random.PRNGKey(0)
    # Mask bits generated once outside the kernel: portable (no in-kernel TPU
    # PRNG) and independent of tile size / grid layout.
    bits = jax.random.bits(rng_key, (B, C), dtype=jnp.uint32)
    rate = float(dropout_rate)
    threshold = min(int(round(rate * (2.0 ** 32))), (1 << 32) - 1)
    kernel = functools.partial(
        _add_pos_dropout_kernel, threshold=threshold, inv_keep=1.0 / (1.0 - rate))

    bits_spec = pl.BlockSpec((tb, tc), lambda i, j: (i, j))
    out2 = pl.pallas_call(
        kernel,
        out_shape=jax.ShapeDtypeStruct((B, C), x.dtype),
        grid=grid,
        in_specs=[x_spec, pos_spec, bits_spec],
        out_specs=out_spec,
        compiler_params=cparams,
        cost_estimate=cost,
    )(x2, pos2, bits)
    return out2.reshape(B, N, H)


if __name__ == "__main__":
    key = jax.random.PRNGKey(0)
    kx, kp, kd = jax.random.split(key, 3)
    B, N, H = 2, 8, 32   # batch, number (tokens), hidden_size
    x = jax.random.normal(kx, (B, N, H), dtype=jnp.float32)
    pos = jax.random.normal(kp, (1, N, H), dtype=jnp.float32)
    ref = x + pos

    # Eval / deterministic path: dropout is identity, output must equal x + pos.
    y = embeddings_forward(x, pos, deterministic=True)
    jax.block_until_ready(y)
    assert y.shape == (B, N, H)
    assert jnp.allclose(y, ref, atol=1e-6, rtol=1e-6)

    # Training path: inverted dropout; the mask is reproducible from the key,
    # so the reference can be computed exactly.
    rate = 0.2
    yd = embeddings_forward(x, pos, dropout_rate=rate, deterministic=False, rng_key=kd)
    jax.block_until_ready(yd)
    bits = jax.random.bits(kd, (B, N * H), dtype=jnp.uint32)
    threshold = min(int(round(rate * (2.0 ** 32))), (1 << 32) - 1)
    keep = (bits >= jnp.uint32(threshold)).reshape(B, N, H)
    ref_drop = jnp.where(keep, ref / (1.0 - rate), 0.0)
    assert jnp.allclose(yd, ref_drop, atol=1e-5, rtol=1e-5)

    print("KERNEL_OK")
</pallas_src>

<mosaic_0001>
module attributes {stable_mosaic.version = 11 : i64} {
  func.func @_add_pos_kernel(%arg0: i32, %arg1: i32, %arg2: memref<2x256xf32, #tpu.memory_space<vmem>>, %arg3: memref<1x256xf32, #tpu.memory_space<vmem>>, %arg4: memref<2x256xf32, #tpu.memory_space<vmem>>) attributes {dimension_semantics = [#tpu.dimension_semantics<parallel>, #tpu.dimension_semantics<parallel>], iteration_bounds = array<i64: 1, 1>, scalar_prefetch = 0 : i64, scratch_operands = 0 : i64, tpu.core_type = #tpu.core_type<tc>, window_params = [{transform_indices = @transform_0, window_bounds = array<i64: 2, 256>}, {transform_indices = @transform_1, window_bounds = array<i64: 1, 256>}, {transform_indices = @transform_2, window_bounds = array<i64: 2, 256>}]} {
    %c0 = arith.constant 0 : index
    %c0_0 = arith.constant 0 : index
    %0 = vector.load %arg2[%c0, %c0_0] : memref<2x256xf32, #tpu.memory_space<vmem>>, vector<2x256xf32>
    %c0_1 = arith.constant 0 : index
    %c0_2 = arith.constant 0 : index
    %1 = vector.load %arg3[%c0_1, %c0_2] : memref<1x256xf32, #tpu.memory_space<vmem>>, vector<1x256xf32>
    %2 = vector.broadcast %1 : vector<1x256xf32> to vector<2x256xf32>
    %3 = arith.addf %0, %2 : vector<2x256xf32>
    %c0_3 = arith.constant 0 : index
    %c0_4 = arith.constant 0 : index
    %4 = vector.load %arg4[%c0_3, %c0_4] : memref<2x256xf32, #tpu.memory_space<vmem>>, vector<2x256xf32>
    tpu.vector_store %arg4[%c0_3, %c0_4], %3 {strides = array<i32>} : memref<2x256xf32, #tpu.memory_space<vmem>>, vector<2x256xf32>,
    return
  }
  func.func @transform_0(%arg0: i32, %arg1: i32) -> (i32, i32) {
    %c0_i32 = arith.constant 0 : i32
    return %arg0, %arg1 : i32, i32
  }
  func.func @transform_1(%arg0: i32, %arg1: i32) -> (i32, i32) {
    %c0_i32 = arith.constant 0 : i32
    %c0_i32_0 = arith.constant 0 : i32
    return %c0_i32, %arg1 : i32, i32
  }
  func.func @transform_2(%arg0: i32, %arg1: i32) -> (i32, i32) {
    %c0_i32 = arith.constant 0 : i32
    return %arg0, %arg1 : i32, i32
  }
}

</mosaic_0001>

<llo_original>
// kernel: tpu_custom_call.1
$region0: #{tpu_custom_call.1}
  #allocation0 [shape = 'u32[]', space=smem, size = 0x4, offset = 0x4, fixed_abs, tag = 'smem constant byte address 0x4 - core index']
  #allocation1 [shape = 'u32[144,128]{1,0:T(1,128)}', space=vmem, size = 0x12000, scoped, tag = 'internal scratch']
  %s0 = inlined_call_operand.hbm [shape: f32[2,256], index: 0, kind: input, shape index: {}]
  %s1 = inlined_call_operand.hbm [shape: f32[1,256], index: 1, kind: input, shape index: {}]
  %s2 = inlined_call_operand.hbm [shape: f32[2,256], index: 2, kind: output, shape index: {}]
  %s3 = sld [smem:[#allocation0]]
  $region26: #{tpu_custom_call.1} parent=0
    _
  %s5 = ssub.s32 1, %s3
  %s6 = scalar_select 0, %s5, %s3
  $region1: #{tpu_custom_call.1} parent=0
    #allocation2 [shape = 'u8[2048]{0}', space=vmem, size = 0x800, scoped, tag = 'input window, operand 0, single buffered']
    #allocation3 [shape = 's32[1]{0}', space=sflag, size = 0x4, scoped, tag = 'scoped memory for tpu_custom_call.1']
    #allocation4 [shape = 's32[1]{0}', space=sflag, size = 0x4, scoped, tag = 'scoped memory for tpu_custom_call.1']
    #allocation5 [shape = 'u8[1024]{0}', space=vmem, size = 0x400, scoped, tag = 'input window, operand 1, single buffered']
    #allocation6 [shape = 's32[1]{0}', space=sflag, size = 0x4, scoped, tag = 'scoped memory for tpu_custom_call.1']
    #allocation7 [shape = 'u8[2048]{0}', space=vmem, size = 0x800, scoped, tag = 'output window, operand 0, single buffered']
    %7 = vsyncpa [#allocation3], 0
    %8 = vsyncpa [#allocation6], 0
    %9 = vsyncpa [#allocation4], 0
    // Predicated region
    $region2: #{tpu_custom_call.1} parent=1 // pred_check
      _
    $region3: #{tpu_custom_call.1} parent=1 // pred_check_branch
      %11 = sbr.rel (0) target = $region5
    $region4: #{tpu_custom_call.1} parent=1 // pred_region
      %s13 = ssub.s32 64, 64
      %14 = vsyncadd [#allocation3], %s13
      %s16 = sshll.u32 [#allocation2], 4
      %s17 = int_to_ptr.vmem [resolvable:$true] %s16
      %19 = dma.hbm_to_vmem [thread:$0]  %s0, 64, %s17, [#allocation3]
    $region5: #{tpu_custom_call.1} parent=1 // pred_fallthru
      _
    // Predicated region
    $region6: #{tpu_custom_call.1} parent=1 // pred_check
      _
    $region7: #{tpu_custom_call.1} parent=1 // pred_check_branch
      %21 = sbr.rel (0) target = $region9
    $region8: #{tpu_custom_call.1} parent=1 // pred_region
      %s23 = ssub.s32 32, 32
      %24 = vsyncadd [#allocation6], %s23
      %s26 = sshll.u32 [#allocation5], 4
      %s27 = int_to_ptr.vmem [resolvable:$true] %s26
      %29 = dma.hbm_to_vmem [thread:$0]  %s1, 32, %s27, [#allocation6]
    $region9: #{tpu_custom_call.1} parent=1 // pred_fallthru
      _
    // Predicated region
    $region10: #{tpu_custom_call.1} parent=1 // pred_check
      _
    $region11: #{tpu_custom_call.1} parent=1 // pred_check_branch
      %31 = sbr.rel (0) target = $region13
    $region12: #{tpu_custom_call.1} parent=1 // pred_region
      %32 = dma.done [#allocation3], 64
    $region13: #{tpu_custom_call.1} parent=1 // pred_fallthru
      _
    // Predicated region
    $region14: #{tpu_custom_call.1} parent=1 // pred_check
      _
    $region15: #{tpu_custom_call.1} parent=1 // pred_check_branch
      %34 = sbr.rel (0) target = $region17
    $region16: #{tpu_custom_call.1} parent=1 // pred_region
      %35 = dma.done [#allocation6], 32
    $region17: #{tpu_custom_call.1} parent=1 // pred_fallthru
      _
    %v36 = vld [vmem:[#allocation2] sm:$0xf]
    %v37 = vld [vmem:[#allocation5] sm:$0x3]
    %v39 = vlaneseq
    %v40 = vshrl.u32 %v39, 7
    %v41 = vsub.s32 0, %v40
    %v42 = vrot.slane %v37, %v41
    %v43 = vlaneseq
    %v44 = vshrl.u32 %v43, 7
    %v45 = vsub.s32 1, %v44
    %v46 = vrot.slane %v37, %v45
    %v47 = vcombine.low %v42, %v46
    %v49 = vunpack.c.l.s4 1983009808
    %v50 = vunpack.c.0.s8 %v49
    %v51 = vlaneseq
    %v52 = vshrl.u32 %v51, 7
    %v53 = vsub.s32 %v50, %v52
    %v54 = vrot.slane %v47, %v53
    %v56 = vadd.f32 %v36, %v54
    %57 = vst [vmem:[#allocation7] sm:$0xf] %v56
    // Predicated region
    $region18: #{tpu_custom_call.1} parent=1 // pred_check
      _
    $region19: #{tpu_custom_call.1} parent=1 // pred_check_branch
      %59 = sbr.rel (0) target = $region21
    $region20: #{tpu_custom_call.1} parent=1 // pred_region
      %s61 = ssub.s32 64, 64
      %62 = vsyncadd [#allocation4], %s61
      %s64 = sshll.u32 [#allocation7], 4
      %s65 = int_to_ptr.vmem [resolvable:$true] %s64
      %67 = dma.vmem_to_hbm [thread:$0]  %s65, 64, %s2, [#allocation4]
    $region21: #{tpu_custom_call.1} parent=1 // pred_fallthru
      _
    // Predicated region
    $region22: #{tpu_custom_call.1} parent=1 // pred_check
      _
    $region23: #{tpu_custom_call.1} parent=1 // pred_check_branch
      %69 = sbr.rel (0) target = $region25
    $region24: #{tpu_custom_call.1} parent=1 // pred_region
      %70 = dma.done [#allocation4], 64
    $region25: #{tpu_custom_call.1} parent=1 // pred_fallthru
      _
    %71 = vsyncpa [#allocation3], 1
    %72 = vsyncpa [#allocation6], 1
    %73 = vsyncpa [#allocation4], 1

</llo_original>
